<compile_context>
chip_gen: v7x
topology: tpu7x:2x2x1
jax: 0.10.0
libtpu: 0.0.40
codegen_flags: <defaults>
</compile_context>

<pallas_src>
import functools
import math

import jax
import jax.numpy as jnp
import numpy as np
from jax.experimental import pallas as pl
from jax.experimental.pallas import tpu as pltpu


# ----------------------------------------------------------------------------
# Parameter / buffer construction (mirrors PyTorch __init__, plain JAX glue)
# ----------------------------------------------------------------------------
def build_pe_table(d_model: int, max_len: int = 5000) -> jnp.ndarray:
    """Returns pe with shape (max_len, 1, d_model), float32 (matches register_buffer)."""
    position = jnp.arange(0, max_len, dtype=jnp.float32)[:, None]          # (max_len, 1)
    div_term = jnp.exp(
        jnp.arange(0, d_model, 2, dtype=jnp.float32) * (-math.log(10000.0) / d_model)
    )                                                                       # (d_model//2,)
    angles = position * div_term                                            # (max_len, d_model//2)
    # pe[:, 0::2] = sin, pe[:, 1::2] = cos  -> interleave
    pe = jnp.stack([jnp.sin(angles), jnp.cos(angles)], axis=-1).reshape(max_len, d_model)
    return pe[:, None, :]                                                   # (max_len, 1, d_model)


# ----------------------------------------------------------------------------
# Pallas kernels
# ----------------------------------------------------------------------------
def _pe_add_kernel(x_ref, pe_ref, o_ref):
    # x_ref: (TS, B, D), pe_ref: (TS, 1, D) -> broadcast add over batch axis.
    o_ref[...] = x_ref[...] + pe_ref[...]


def _pe_add_dropout_kernel(x_ref, pe_ref, bits_ref, o_ref, *, threshold, scale):
    # Training-mode forward: (x + pe) followed by inverted dropout.
    # keep iff bits >= threshold, where threshold ~= p * 2^32  -> P(keep) = 1 - p.
    y = x_ref[...] + pe_ref[...]
    keep = bits_ref[...] >= jnp.uint32(threshold)
    scaled = y * jnp.asarray(scale, dtype=y.dtype)
    o_ref[...] = jnp.where(keep, scaled, jnp.zeros_like(y)).astype(o_ref.dtype)


# ----------------------------------------------------------------------------
# Wrapper
# ----------------------------------------------------------------------------
def _choose_tile_rows(S: int, row_bytes: int, target_block_bytes: int = 2 << 20) -> int:
    """Largest multiple-of-8 row count whose x-block is ~target_block_bytes.

    With 2 (eval) or 3 (train) tiled arrays, double-buffered, this keeps the
    resident VMEM footprint ~8-13 MiB: safe under the default scoped VMEM limit
    on v5e (16 MiB), v6e (32 MiB) and v7x (32 MiB scoped / 64 MiB physical).
    """
    rows = max(8, (target_block_bytes // max(row_bytes, 1)) // 8 * 8)
    return int(min(S, rows))


def positional_encoding_forward(
    x: jnp.ndarray,
    pe: jnp.ndarray,
    *,
    dropout_p: float = 0.1,
    train: bool = False,
    rng_key=None,
    tile_rows: int | None = None,
) -> jnp.ndarray:
    """x: (S, B, D). pe: (max_len, 1, D). Returns (S, B, D) with x's dtype."""
    S, B, D = x.shape
    pe_slice = pe[:S].astype(x.dtype)  # (S, 1, D)

    itemsize = jnp.dtype(x.dtype).itemsize
    row_bytes = B * D * itemsize
    TS = tile_rows if tile_rows is not None else _choose_tile_rows(S, row_bytes)
    TS = int(min(TS, S))
    grid = (pl.cdiv(S, TS),)

    # Last two block dims (B, D) equal the full array dims, so the (8,128)
    # tiling constraint is always satisfied; at the module's d_model=512 the
    # lane axis is a dense multiple of 128.
    x_spec = pl.BlockSpec((TS, B, D), lambda i: (i, 0, 0))
    pe_spec = pl.BlockSpec((TS, 1, D), lambda i: (i, 0, 0))
    out_spec = pl.BlockSpec((TS, B, D), lambda i: (i, 0, 0))
    out_shape = jax.ShapeDtypeStruct((S, B, D), x.dtype)
    cparams = pltpu.CompilerParams(dimension_semantics=("parallel",))

    if (not train) or dropout_p == 0.0:
        # Eval mode: dropout is identity -> just the broadcasted add.
        return pl.pallas_call(
            _pe_add_kernel,
            out_shape=out_shape,
            grid=grid,
            in_specs=[x_spec, pe_spec],
            out_specs=out_spec,
            compiler_params=cparams,
        )(x, pe_slice)

    if rng_key is None:
        raise ValueError("rng_key is required when train=True and dropout_p > 0")

    bits = jax.random.bits(rng_key, (S, B, D), dtype=jnp.uint32)
    threshold = min(int(round(float(dropout_p) * (1 << 32))), (1 << 32) - 1)
    scale = 1.0 / (1.0 - float(dropout_p))
    bits_spec = pl.BlockSpec((TS, B, D), lambda i: (i, 0, 0))

    return pl.pallas_call(
        functools.partial(_pe_add_dropout_kernel, threshold=threshold, scale=scale),
        out_shape=out_shape,
        grid=grid,
        in_specs=[x_spec, pe_spec, bits_spec],
        out_specs=out_spec,
        compiler_params=cparams,
    )(x, pe_slice, bits)


# ----------------------------------------------------------------------------
# Demo / self-test
# ----------------------------------------------------------------------------
if __name__ == "__main__":
    # Small shapes consistent with the module's forward: x is (seq, batch, d_model).
    S, B, D = 16, 2, 32
    MAX_LEN = 64
    P_DROP = 0.1

    key = jax.random.PRNGKey(0)
    kx, kd = jax.random.split(key)
    x = jax.random.normal(kx, (S, B, D), dtype=jnp.float32)
    pe = build_pe_table(D, max_len=MAX_LEN)
    ref = np.asarray(x + pe[:S])

    # Eval-mode (deterministic) path, single block.
    out_eval = jax.block_until_ready(
        positional_encoding_forward(x, pe, dropout_p=P_DROP, train=False)
    )
    np.testing.assert_allclose(np.asarray(out_eval), ref, rtol=1e-6, atol=1e-6)

    # Eval-mode path with an explicit multi-step grid (exercises the tiling).
    out_tiled = jax.block_until_ready(
        positional_encoding_forward(x, pe, dropout_p=P_DROP, train=False, tile_rows=8)
    )
    np.testing.assert_allclose(np.asarray(out_tiled), ref, rtol=1e-6, atol=1e-6)

    # bf16 input path (halved HBM traffic for this mem-bound op).
    out_bf16 = jax.block_until_ready(
        positional_encoding_forward(x.astype(jnp.bfloat16), pe, dropout_p=P_DROP, train=False)
    )
    assert out_bf16.dtype == jnp.bfloat16
    np.testing.assert_allclose(np.asarray(out_bf16, dtype=np.float32), ref, rtol=2e-2, atol=5e-2)

    # Training-mode path (inverted dropout). Reproduce the exact expected mask
    # from the same PRNG key and threshold used inside the wrapper.
    out_train = jax.block_until_ready(
        positional_encoding_forward(x, pe, dropout_p=P_DROP, train=True, rng_key=kd)
    )
    assert out_train.shape == (S, B, D)
    bits = np.asarray(jax.random.bits(kd, (S, B, D), dtype=jnp.uint32))
    threshold = min(int(round(P_DROP * (1 << 32))), (1 << 32) - 1)
    keep = bits >= np.uint32(threshold)
    expected = np.where(keep, ref / (1.0 - P_DROP), 0.0).astype(np.float32)
    np.testing.assert_allclose(np.asarray(out_train), expected, rtol=1e-5, atol=1e-6)

    print("KERNEL_OK")
</pallas_src>

<mosaic_0001>
module attributes {stable_mosaic.version = 11 : i64} {
  func.func @_pe_add_kernel(%arg0: i32, %arg1: memref<16x2x32xf32, #tpu.memory_space<vmem>>, %arg2: memref<16x1x32xf32, #tpu.memory_space<vmem>>, %arg3: memref<16x2x32xf32, #tpu.memory_space<vmem>>) attributes {dimension_semantics = [#tpu.dimension_semantics<parallel>], iteration_bounds = array<i64: 1>, scalar_prefetch = 0 : i64, scratch_operands = 0 : i64, tpu.core_type = #tpu.core_type<tc>, window_params = [{transform_indices = @transform_0, window_bounds = array<i64: 16, 2, 32>}, {transform_indices = @transform_1, window_bounds = array<i64: 16, 1, 32>}, {transform_indices = @transform_2, window_bounds = array<i64: 16, 2, 32>}]} {
    %c0 = arith.constant 0 : index
    %c0_0 = arith.constant 0 : index
    %c0_1 = arith.constant 0 : index
    %0 = vector.load %arg1[%c0, %c0_0, %c0_1] : memref<16x2x32xf32, #tpu.memory_space<vmem>>, vector<16x2x32xf32>
    %c0_2 = arith.constant 0 : index
    %c0_3 = arith.constant 0 : index
    %c0_4 = arith.constant 0 : index
    %1 = vector.load %arg2[%c0_2, %c0_3, %c0_4] : memref<16x1x32xf32, #tpu.memory_space<vmem>>, vector<16x1x32xf32>
    %2 = vector.broadcast %1 : vector<16x1x32xf32> to vector<16x2x32xf32>
    %3 = arith.addf %0, %2 : vector<16x2x32xf32>
    %c0_5 = arith.constant 0 : index
    %c0_6 = arith.constant 0 : index
    %c0_7 = arith.constant 0 : index
    %4 = vector.load %arg3[%c0_5, %c0_6, %c0_7] : memref<16x2x32xf32, #tpu.memory_space<vmem>>, vector<16x2x32xf32>
    tpu.vector_store %arg3[%c0_5, %c0_6, %c0_7], %3 {strides = array<i32>} : memref<16x2x32xf32, #tpu.memory_space<vmem>>, vector<16x2x32xf32>,
    return
  }
  func.func @transform_0(%arg0: i32) -> (i32, i32, i32) {
    %c0_i32 = arith.constant 0 : i32
    %c0_i32_0 = arith.constant 0 : i32
    %c0_i32_1 = arith.constant 0 : i32
    return %arg0, %c0_i32, %c0_i32_0 : i32, i32, i32
  }
  func.func @transform_1(%arg0: i32) -> (i32, i32, i32) {
    %c0_i32 = arith.constant 0 : i32
    %c0_i32_0 = arith.constant 0 : i32
    %c0_i32_1 = arith.constant 0 : i32
    return %arg0, %c0_i32, %c0_i32_0 : i32, i32, i32
  }
  func.func @transform_2(%arg0: i32) -> (i32, i32, i32) {
    %c0_i32 = arith.constant 0 : i32
    %c0_i32_0 = arith.constant 0 : i32
    %c0_i32_1 = arith.constant 0 : i32
    return %arg0, %c0_i32, %c0_i32_0 : i32, i32, i32
  }
}

</mosaic_0001>

<llo_original>
// kernel: tpu_custom_call.1
$region0: #{tpu_custom_call.1}
  #allocation0 [shape = 'u32[]', space=smem, size = 0x4, offset = 0x4, fixed_abs, tag = 'smem constant byte address 0x4 - core index']
  #allocation1 [shape = 'u32[144,128]{1,0:T(1,128)}', space=vmem, size = 0x12000, scoped, tag = 'internal scratch']
  %s0 = inlined_call_operand.hbm [shape: f32[16,2,32], index: 0, kind: input, shape index: {}]
  %s1 = inlined_call_operand.hbm [shape: f32[16,1,32], index: 1, kind: input, shape index: {}]
  %s2 = inlined_call_operand.hbm [shape: f32[16,2,32], index: 2, kind: output, shape index: {}]
  %s3 = sld [smem:[#allocation0]]
  $region26: #{tpu_custom_call.1} parent=0
    _
  %s5 = ssub.s32 1, %s3
  %s6 = scalar_select 0, %s5, %s3
  $region1: #{tpu_custom_call.1} parent=0
    #allocation2 [shape = 'u8[16384]{0}', space=vmem, size = 0x4000, scoped, tag = 'input window, operand 0, single buffered']
    #allocation3 [shape = 's32[1]{0}', space=sflag, size = 0x4, scoped, tag = 'scoped memory for tpu_custom_call.1']
    #allocation4 [shape = 's32[1]{0}', space=sflag, size = 0x4, scoped, tag = 'scoped memory for tpu_custom_call.1']
    #allocation5 [shape = 'u8[8192]{0}', space=vmem, size = 0x2000, scoped, tag = 'input window, operand 1, single buffered']
    #allocation6 [shape = 's32[1]{0}', space=sflag, size = 0x4, scoped, tag = 'scoped memory for tpu_custom_call.1']
    #allocation7 [shape = 'u8[16384]{0}', space=vmem, size = 0x4000, scoped, tag = 'output window, operand 0, single buffered']
    %7 = vsyncpa [#allocation3], 0
    %8 = vsyncpa [#allocation6], 0
    %9 = vsyncpa [#allocation4], 0
    // Predicated region
    $region2: #{tpu_custom_call.1} parent=1 // pred_check
      _
    $region3: #{tpu_custom_call.1} parent=1 // pred_check_branch
      %11 = sbr.rel (0) target = $region5
    $region4: #{tpu_custom_call.1} parent=1 // pred_region
      %s13 = ssub.s32 512, 512
      %14 = vsyncadd [#allocation3], %s13
      %s15 = sshll.u32 [#allocation2], 4
      %s16 = int_to_ptr.vmem [resolvable:$true] %s15
      %21 = dma.hbm_to_vmem [thread:$0]  %s0, 512, %s16, [#allocation3], 32, 32, 2
    $region5: #{tpu_custom_call.1} parent=1 // pred_fallthru
      _
    // Predicated region
    $region6: #{tpu_custom_call.1} parent=1 // pred_check
      _
    $region7: #{tpu_custom_call.1} parent=1 // pred_check_branch
      %23 = sbr.rel (0) target = $region9
    $region8: #{tpu_custom_call.1} parent=1 // pred_region
      %s25 = ssub.s32 256, 256
      %26 = vsyncadd [#allocation6], %s25
      %s27 = sshll.u32 [#allocation5], 4
      %s28 = int_to_ptr.vmem [resolvable:$true] %s27
      %33 = dma.hbm_to_vmem [thread:$0]  %s1, 256, %s28, [#allocation6], 16, 16, 1
    $region9: #{tpu_custom_call.1} parent=1 // pred_fallthru
      _
    // Predicated region
    $region10: #{tpu_custom_call.1} parent=1 // pred_check
      _
    $region11: #{tpu_custom_call.1} parent=1 // pred_check_branch
      %35 = sbr.rel (0) target = $region13
    $region12: #{tpu_custom_call.1} parent=1 // pred_region
      %36 = dma.done [#allocation3], 512
    $region13: #{tpu_custom_call.1} parent=1 // pred_fallthru
      _
    // Predicated region
    $region14: #{tpu_custom_call.1} parent=1 // pred_check
      _
    $region15: #{tpu_custom_call.1} parent=1 // pred_check_branch
      %38 = sbr.rel (0) target = $region17
    $region16: #{tpu_custom_call.1} parent=1 // pred_region
      %39 = dma.done [#allocation6], 256
    $region17: #{tpu_custom_call.1} parent=1 // pred_fallthru
      _
    %v40 = vld [vmem:[#allocation2] sm:$0x3]
    %v41 = vld [vmem:[#allocation2 + $0x2] sm:$0x3]
    %v42 = vld [vmem:[#allocation2 + $0x4] sm:$0x3]
    %v43 = vld [vmem:[#allocation2 + $0x6] sm:$0x3]
    %v44 = vld [vmem:[#allocation2 + $0x8] sm:$0x3]
    %v45 = vld [vmem:[#allocation2 + $0xa] sm:$0x3]
    %v46 = vld [vmem:[#allocation2 + $0xc] sm:$0x3]
    %v47 = vld [vmem:[#allocation2 + $0xe] sm:$0x3]
    %v48 = vld [vmem:[#allocation2 + $0x10] sm:$0x3]
    %v49 = vld [vmem:[#allocation2 + $0x12] sm:$0x3]
    %v50 = vld [vmem:[#allocation2 + $0x14] sm:$0x3]
    %v51 = vld [vmem:[#allocation2 + $0x16] sm:$0x3]
    %v52 = vld [vmem:[#allocation2 + $0x18] sm:$0x3]
    %v53 = vld [vmem:[#allocation2 + $0x1a] sm:$0x3]
    %v54 = vld [vmem:[#allocation2 + $0x1c] sm:$0x3]
    %v55 = vld [vmem:[#allocation2 + $0x1e] sm:$0x3]
    %v56 = vld [vmem:[#allocation5] sm:$0x1]
    %v57 = vld [vmem:[#allocation5 + $0x1] sm:$0x1]
    %v58 = vld [vmem:[#allocation5 + $0x2] sm:$0x1]
    %v59 = vld [vmem:[#allocation5 + $0x3] sm:$0x1]
    %v60 = vld [vmem:[#allocation5 + $0x4] sm:$0x1]
    %v61 = vld [vmem:[#allocation5 + $0x5] sm:$0x1]
    %v62 = vld [vmem:[#allocation5 + $0x6] sm:$0x1]
    %v63 = vld [vmem:[#allocation5 + $0x7] sm:$0x1]
    %v64 = vld [vmem:[#allocation5 + $0x8] sm:$0x1]
    %v65 = vld [vmem:[#allocation5 + $0x9] sm:$0x1]
    %v66 = vld [vmem:[#allocation5 + $0xa] sm:$0x1]
    %v67 = vld [vmem:[#allocation5 + $0xb] sm:$0x1]
    %v68 = vld [vmem:[#allocation5 + $0xc] sm:$0x1]
    %v69 = vld [vmem:[#allocation5 + $0xd] sm:$0x1]
    %v70 = vld [vmem:[#allocation5 + $0xe] sm:$0x1]
    %v71 = vld [vmem:[#allocation5 + $0xf] sm:$0x1]
    %v88 = vlaneseq
    %v89 = vshrl.u32 %v88, 7
    %v90 = vsub.s32 0, %v89
    %v91 = vrot.slane %v56, %v90
    %v92 = vlaneseq
    %v93 = vshrl.u32 %v92, 7
    %v94 = vsub.s32 0, %v93
    %v95 = vrot.slane %v57, %v94
    %v96 = vlaneseq
    %v97 = vshrl.u32 %v96, 7
    %v98 = vsub.s32 0, %v97
    %v99 = vrot.slane %v58, %v98
    %v100 = vlaneseq
    %v101 = vshrl.u32 %v100, 7
    %v102 = vsub.s32 0, %v101
    %v103 = vrot.slane %v59, %v102
    %v104 = vlaneseq
    %v105 = vshrl.u32 %v104, 7
    %v106 = vsub.s32 0, %v105
    %v107 = vrot.slane %v60, %v106
    %v108 = vlaneseq
    %v109 = vshrl.u32 %v108, 7
    %v110 = vsub.s32 0, %v109
    %v111 = vrot.slane %v61, %v110
    %v112 = vlaneseq
    %v113 = vshrl.u32 %v112, 7
    %v114 = vsub.s32 0, %v113
    %v115 = vrot.slane %v62, %v114
    %v116 = vlaneseq
    %v117 = vshrl.u32 %v116, 7
    %v118 = vsub.s32 0, %v117
    %v119 = vrot.slane %v63, %v118
    %v120 = vlaneseq
    %v121 = vshrl.u32 %v120, 7
    %v122 = vsub.s32 0, %v121
    %v123 = vrot.slane %v64, %v122
    %v124 = vlaneseq
    %v125 = vshrl.u32 %v124, 7
    %v126 = vsub.s32 0, %v125
    %v127 = vrot.slane %v65, %v126
    %v128 = vlaneseq
    %v129 = vshrl.u32 %v128, 7
    %v130 = vsub.s32 0, %v129
    %v131 = vrot.slane %v66, %v130
    %v132 = vlaneseq
    %v133 = vshrl.u32 %v132, 7
    %v134 = vsub.s32 0, %v133
    %v135 = vrot.slane %v67, %v134
    %v136 = vlaneseq
    %v137 = vshrl.u32 %v136, 7
    %v138 = vsub.s32 0, %v137
    %v139 = vrot.slane %v68, %v138
    %v140 = vlaneseq
    %v141 = vshrl.u32 %v140, 7
    %v142 = vsub.s32 0, %v141
    %v143 = vrot.slane %v69, %v142
    %v144 = vlaneseq
    %v145 = vshrl.u32 %v144, 7
    %v146 = vsub.s32 0, %v145
    %v147 = vrot.slane %v70, %v146
    %v148 = vlaneseq
    %v149 = vshrl.u32 %v148, 7
    %v150 = vsub.s32 0, %v149
    %v151 = vrot.slane %v71, %v150
    %v168 = vadd.f32 %v40, %v91
    %v169 = vadd.f32 %v41, %v95
    %v170 = vadd.f32 %v42, %v99
    %v171 = vadd.f32 %v43, %v103
    %v172 = vadd.f32 %v44, %v107
    %v173 = vadd.f32 %v45, %v111
    %v174 = vadd.f32 %v46, %v115
    %v175 = vadd.f32 %v47, %v119
    %v176 = vadd.f32 %v48, %v123
    %v177 = vadd.f32 %v49, %v127
    %v178 = vadd.f32 %v50, %v131
    %v179 = vadd.f32 %v51, %v135
    %v180 = vadd.f32 %v52, %v139
    %v181 = vadd.f32 %v53, %v143
    %v182 = vadd.f32 %v54, %v147
    %v183 = vadd.f32 %v55, %v151
    %vm184 = vcmask 254976
    %185 = vst.msk [vmem:[#allocation7] sm:$0x3] %vm184, %v168
    %186 = vst.msk [vmem:[#allocation7 + $0x2] sm:$0x3] %vm184, %v169
    %187 = vst.msk [vmem:[#allocation7 + $0x4] sm:$0x3] %vm184, %v170
    %188 = vst.msk [vmem:[#allocation7 + $0x6] sm:$0x3] %vm184, %v171
    %189 = vst.msk [vmem:[#allocation7 + $0x8] sm:$0x3] %vm184, %v172
    %190 = vst.msk [vmem:[#allocation7 + $0xa] sm:$0x3] %vm184, %v173
    %191 = vst.msk [vmem:[#allocation7 + $0xc] sm:$0x3] %vm184, %v174
    %192 = vst.msk [vmem:[#allocation7 + $0xe] sm:$0x3] %vm184, %v175
    %193 = vst.msk [vmem:[#allocation7 + $0x10] sm:$0x3] %vm184, %v176
    %194 = vst.msk [vmem:[#allocation7 + $0x12] sm:$0x3] %vm184, %v177
    %195 = vst.msk [vmem:[#allocation7 + $0x14] sm:$0x3] %vm184, %v178
    %196 = vst.msk [vmem:[#allocation7 + $0x16] sm:$0x3] %vm184, %v179
    %197 = vst.msk [vmem:[#allocation7 + $0x18] sm:$0x3] %vm184, %v180
    %198 = vst.msk [vmem:[#allocation7 + $0x1a] sm:$0x3] %vm184, %v181
    %199 = vst.msk [vmem:[#allocation7 + $0x1c] sm:$0x3] %vm184, %v182
    %200 = vst.msk [vmem:[#allocation7 + $0x1e] sm:$0x3] %vm184, %v183
    // Predicated region
    $region18: #{tpu_custom_call.1} parent=1 // pred_check
      _
    $region19: #{tpu_custom_call.1} parent=1 // pred_check_branch
      %202 = sbr.rel (0) target = $region21
    $region20: #{tpu_custom_call.1} parent=1 // pred_region
      %s204 = ssub.s32 512, 512
      %205 = vsyncadd [#allocation4], %s204
      %s206 = sshll.u32 [#allocation7], 4
      %s207 = int_to_ptr.vmem [resolvable:$true] %s206
      %212 = dma.vmem_to_hbm [thread:$0]  %s207, 512, %s2, [#allocation4], 32, 32, 2
    $region21: #{tpu_custom_call.1} parent=1 // pred_fallthru
      _
    // Predicated region
    $region22: #{tpu_custom_call.1} parent=1 // pred_check
      _
    $region23: #{tpu_custom_call.1} parent=1 // pred_check_branch
      %214 = sbr.rel (0) target = $region25
    $region24: #{tpu_custom_call.1} parent=1 // pred_region
      %215 = dma.done [#allocation4], 512
    $region25: #{tpu_custom_call.1} parent=1 // pred_fallthru
      _
    %216 = vsyncpa [#allocation3], 1
    %217 = vsyncpa [#allocation6], 1
    %218 = vsyncpa [#allocation4], 1

</llo_original>
